<compile_context>
chip_gen: v5e
topology: v5e:2x2
jax: 0.10.0
libtpu: 0.0.40
codegen_flags: <defaults>
</compile_context>

<pallas_src>
import functools

import jax
import jax.numpy as jnp
from jax.experimental import pallas as pl
from jax.experimental.pallas import tpu as pltpu

# Finite "minus infinity": masked lanes/rows get exactly-zero probability, no NaN/inf.
# NOTE: -1e30 would overflow to -inf for fp16 inputs; guard the dtype if fp16 is allowed.
_NEG_FILL = -1e30


def _ts_loss_tile_kernel(t_ref, s_ref, tgt_ref, o_ref, *, n_rows, n_cols, row_tile):
    """One (row_tile, c_pad) logits tile -> per-tile partial sum of (nll_row + kl_row).

    Out-of-bounds lanes/rows of a partial block contain stale VMEM data; they are masked
    to _NEG_FILL BEFORE the exps (not just at the final sum), so no inf/NaN can poison
    the tile partial.
    """
    tn, c_pad = s_ref.shape

    row = (pl.program_id(0) * row_tile
           + jax.lax.broadcasted_iota(jnp.int32, (tn, 1), 0))          # (TN, 1)
    col = jax.lax.broadcasted_iota(jnp.int32, (tn, c_pad), 1)          # (TN, C_pad)
    row_valid = row < n_rows                                           # (TN, 1) bool
    valid = (col < n_cols) & row_valid                                 # (TN, C_pad) bool

    t = jnp.where(valid, t_ref[...].astype(jnp.float32), _NEG_FILL)
    s = jnp.where(valid, s_ref[...].astype(jnp.float32), _NEG_FILL)

    # ---- student log-softmax / softmax (shared exp, one exact per-row reciprocal) ----
    s_max = jnp.max(s, axis=-1, keepdims=True)
    s_shift = s - s_max
    s_exp = jnp.exp(s_shift)
    s_sum = jnp.sum(s_exp, axis=-1, keepdims=True)
    log_preds = s_shift - jnp.log(s_sum)                 # log_softmax(student, -1)
    prob2 = s_exp * pl.reciprocal(s_sum, approx=False)   # softmax(student, -1)

    # ---- teacher softmax ----
    t_max = jnp.max(t, axis=-1, keepdims=True)
    t_exp = jnp.exp(t - t_max)
    t_sum = jnp.sum(t_exp, axis=-1, keepdims=True)
    prob1 = t_exp * pl.reciprocal(t_sum, approx=False)   # softmax(teacher, -1)

    # ---- KL-ish term, epsilon-preserving (matches the PyTorch formula):
    #        sum_c p1 * log(1e-6 + p1 / (p2 + 1e-6))
    # The f32 divide is replaced by an exact EUP reciprocal + multiply.  Masked lanes
    # contribute exactly 0 because prob1 == 0 there.
    ratio = prob1 * pl.reciprocal(prob2 + 1e-6, approx=False)
    kl_elem = prob1 * jnp.log(1e-6 + ratio)

    # ---- fuse the NLL gather with the KL lane reduction: one XLU reduction per row,
    # no (TN, C_pad) one-hot f32 temporary.  Valid targets are < n_cols, so the gate
    # never selects a masked lane.
    combined = kl_elem - jnp.where(col == tgt_ref[...], log_preds, 0.0)
    row_loss = jnp.sum(combined, axis=-1, keepdims=True)               # (TN, 1)

    partial = jnp.sum(jnp.where(row_valid, row_loss, 0.0))

    # Aligned, lane-dense (1, 8, 128) output block; scalar at [0, 0, 0], zeros elsewhere,
    # so the wrapper uses a contiguous jnp.sum(partials) (no strided [:, 0, 0] gather).
    sub = jax.lax.broadcasted_iota(jnp.int32, (1, 8, 128), 1)
    lane = jax.lax.broadcasted_iota(jnp.int32, (1, 8, 128), 2)
    o_ref[...] = jnp.where((sub == 0) & (lane == 0), partial, 0.0)


def _vmem_capacity_bytes():
    # Trace-time hardware query; fall back to the smallest per-TC VMEM (v7x: 64 MiB)
    # so the sizing stays conservative if the query is unavailable.
    try:
        return int(pltpu.get_tpu_info().vmem_capacity_bytes)
    except Exception:
        return 64 * 1024 * 1024


def _default_row_tile(c_pad, itemsize):
    """Largest 8-aligned row tile whose inputs AND f32 intermediates fit the VMEM budget."""
    cap = _vmem_capacity_bytes()
    # Working-set budget with headroom under the per-TC capacity:
    #   v7x (64 MiB)  -> ~36 MiB;  v5e/v6e (128 MiB) -> ~72 MiB (bigger tiles amortize
    #   the ~0.35 us per-grid-step overhead).
    budget = (36 << 20) if cap <= (64 << 20) else (72 << 20)
    # Per row: 2 inputs x 2 pipeline buffers x itemsize + ~8 full-tile f32 temporaries.
    per_row = c_pad * (2 * 2 * itemsize + 8 * 4)
    rows = budget // per_row
    rows = max(8, (rows // 8) * 8)
    return int(min(rows, 1024))


def teacher_student_loss(teacher_output, student_output, target, *, row_tile=None):
    """teacher_output, student_output: (N, C) float (f32/bf16); target: (N,) int labels."""
    n, c = student_output.shape
    assert teacher_output.shape == (n, c)
    c_pad = max(128, pl.cdiv(c, 128) * 128)
    itemsize = max(int(jnp.dtype(student_output.dtype).itemsize),
                   int(jnp.dtype(teacher_output.dtype).itemsize))

    if row_tile is None:
        row_tile = _default_row_tile(c_pad, itemsize)
    row_tile = max(8, (int(row_tile) // 8) * 8)
    row_tile = min(row_tile, pl.cdiv(n, 8) * 8)          # never larger than the 8-padded N
    num_tiles = pl.cdiv(n, row_tile)

    # No wrapper-side padding of the logits: HBM traffic is exactly 2*N*C*itemsize in
    # (plus the tiny targets / per-tile partials).  Target reshape is metadata-only.
    tgt2d = target.astype(jnp.int32).reshape(n, 1)

    kernel = functools.partial(_ts_loss_tile_kernel,
                               n_rows=n, n_cols=c, row_tile=row_tile)

    # VMEM request derived from actual usage; capped well under v7x's 64 MiB per-TC VMEM.
    tile_elems = row_tile * c_pad
    vmem_need = (2 * 2 * tile_elems * itemsize    # double-buffered teacher + student tiles
                 + 8 * tile_elems * 4             # f32 intermediates headroom
                 + (2 << 20))                     # targets, partials, compiler slack
    vmem_cap = (48 << 20) if _vmem_capacity_bytes() <= (64 << 20) else (96 << 20)
    vmem_limit = int(min(max(vmem_need, 16 << 20), vmem_cap))

    cost = pl.CostEstimate(
        flops=12 * n * c_pad,
        transcendentals=4 * n * c_pad,   # 2 exp + 1 log + 1 rcp per element (+ per-row rcps)
        bytes_accessed=2 * n * c * itemsize + 4 * n + num_tiles * 8 * 128 * 4,
    )

    partials = pl.pallas_call(
        kernel,
        out_shape=jax.ShapeDtypeStruct((num_tiles, 8, 128), jnp.float32),
        grid_spec=pltpu.PrefetchScalarGridSpec(
            num_scalar_prefetch=0,
            grid=(num_tiles,),
            in_specs=[
                pl.BlockSpec((row_tile, c_pad), lambda i: (i, 0)),
                pl.BlockSpec((row_tile, c_pad), lambda i: (i, 0)),
                pl.BlockSpec((row_tile, 1), lambda i: (i, 0)),
            ],
            out_specs=pl.BlockSpec((1, 8, 128), lambda i: (i, 0, 0)),
        ),
        compiler_params=pltpu.CompilerParams(
            dimension_semantics=("parallel",),   # lets v7x shard the row grid across its 2 TCs
            vmem_limit_bytes=vmem_limit,
        ),
        cost_estimate=cost,
    )(teacher_output, student_output, tgt2d)

    # Partials are zero everywhere except [i, 0, 0] -> contiguous full-array sum is cheapest.
    return jnp.sum(partials) / jnp.float32(n)


def _reference(teacher_output, student_output, target):
    # Pure-JAX reference mirroring the PyTorch module (computed in f32).
    t = teacher_output.astype(jnp.float32)
    s = student_output.astype(jnp.float32)
    log_preds = jax.nn.log_softmax(s, axis=-1)
    nll = -jnp.mean(jnp.take_along_axis(log_preds, target[:, None], axis=-1))
    p1 = jax.nn.softmax(t, axis=-1)
    p2 = jax.nn.softmax(s, axis=-1)
    kl = jnp.sum(p1 * jnp.log(1e-6 + p1 / (p2 + 1e-6)), axis=1)
    return nll + jnp.mean(kl)


if __name__ == "__main__":
    key = jax.random.PRNGKey(0)

    # Case 1: small aligned-ish case (N=8, C=32 -> 128-lane block, lane masking only).
    k1, k2, k3, key = jax.random.split(key, 4)
    n, c = 8, 32
    teacher = jax.random.normal(k1, (n, c), dtype=jnp.float32)
    student = jax.random.normal(k2, (n, c), dtype=jnp.float32)
    target = jax.random.randint(k3, (n,), 0, c, dtype=jnp.int32)
    loss = jax.block_until_ready(teacher_student_loss(teacher, student, target))
    ref = _reference(teacher, student, target)
    assert jnp.allclose(loss, ref, rtol=1e-5, atol=1e-5), (loss, ref)

    # Case 2: ragged N and C (exercises row + lane masking of partial blocks).
    k1, k2, k3, key = jax.random.split(key, 4)
    n, c = 13, 50
    teacher = jax.random.normal(k1, (n, c), dtype=jnp.float32)
    student = jax.random.normal(k2, (n, c), dtype=jnp.float32)
    target = jax.random.randint(k3, (n,), 0, c, dtype=jnp.int32)
    loss = jax.block_until_ready(teacher_student_loss(teacher, student, target))
    ref = _reference(teacher, student, target)
    assert jnp.allclose(loss, ref, rtol=1e-5, atol=1e-5), (loss, ref)

    # Case 3: multiple row tiles (exercises the parallel grid + partial-sum reduction).
    k1, k2, k3, key = jax.random.split(key, 4)
    n, c = 48, 32
    teacher = jax.random.normal(k1, (n, c), dtype=jnp.float32)
    student = jax.random.normal(k2, (n, c), dtype=jnp.float32)
    target = jax.random.randint(k3, (n,), 0, c, dtype=jnp.int32)
    loss = jax.block_until_ready(
        teacher_student_loss(teacher, student, target, row_tile=16))
    ref = _reference(teacher, student, target)
    assert jnp.allclose(loss, ref, rtol=1e-5, atol=1e-5), (loss, ref)

    print("KERNEL_OK")
</pallas_src>

<mosaic_0001>
module attributes {stable_mosaic.version = 11 : i64} {
  func.func @_ts_loss_tile_kernel(%arg0: i32, %arg1: memref<8x128xf32, #tpu.memory_space<vmem>>, %arg2: memref<8x128xf32, #tpu.memory_space<vmem>>, %arg3: memref<8x1xi32, #tpu.memory_space<vmem>>, %arg4: memref<1x8x128xf32, #tpu.memory_space<vmem>>) attributes {dimension_semantics = [#tpu.dimension_semantics<parallel>], iteration_bounds = array<i64: 1>, scalar_prefetch = 0 : i64, scratch_operands = 0 : i64, tpu.core_type = #tpu.core_type<tc>, window_params = [{transform_indices = @transform_0, window_bounds = array<i64: 8, 128>}, {transform_indices = @transform_1, window_bounds = array<i64: 8, 128>}, {transform_indices = @transform_2, window_bounds = array<i64: 8, 1>}, {transform_indices = @transform_3, window_bounds = array<i64: 1, 8, 128>}]} {
    %c8_i32 = arith.constant 8 : i32
    %0 = arith.muli %arg0, %c8_i32 : i32
    %1 = tpu.iota {dimensions = array<i32: 0>} : vector<8x1xi32>
    %2 = vector.broadcast %0 : i32 to vector<8x1xi32>
    %3 = arith.addi %2, %1 : vector<8x1xi32>
    %4 = tpu.iota {dimensions = array<i32: 1>} : vector<8x128xi32>
    %c8_i32_0 = arith.constant 8 : i32
    %5 = vector.broadcast %c8_i32_0 : i32 to vector<8x1xi32>
    %6 = arith.cmpi slt, %3, %5 : vector<8x1xi32>
    %c32_i32 = arith.constant 32 : i32
    %7 = vector.broadcast %c32_i32 : i32 to vector<8x128xi32>
    %8 = arith.cmpi slt, %4, %7 : vector<8x128xi32>
    %9 = vector.broadcast %6 : vector<8x1xi1> to vector<8x128xi1>
    %10 = arith.andi %8, %9 : vector<8x128xi1>
    %c0 = arith.constant 0 : index
    %c0_1 = arith.constant 0 : index
    %11 = vector.load %arg1[%c0, %c0_1] : memref<8x128xf32, #tpu.memory_space<vmem>>, vector<8x128xf32>
    %cst = arith.constant -1.000000e+30 : f32
    %12 = vector.broadcast %cst : f32 to vector<8x128xf32>
    %13 = arith.select %10, %11, %12 : vector<8x128xi1>, vector<8x128xf32>
    %c0_2 = arith.constant 0 : index
    %c0_3 = arith.constant 0 : index
    %14 = vector.load %arg2[%c0_2, %c0_3] : memref<8x128xf32, #tpu.memory_space<vmem>>, vector<8x128xf32>
    %cst_4 = arith.constant -1.000000e+30 : f32
    %15 = vector.broadcast %cst_4 : f32 to vector<8x128xf32>
    %16 = arith.select %10, %14, %15 : vector<8x128xi1>, vector<8x128xf32>
    %cst_5 = arith.constant dense<0xFF800000> : vector<8xf32>
    %17 = vector.multi_reduction <maximumf>, %16, %cst_5 [1] : vector<8x128xf32> to vector<8xf32>
    %18 = vector.shape_cast %17 : vector<8xf32> to vector<8x1xf32>
    %19 = vector.broadcast %18 : vector<8x1xf32> to vector<8x128xf32>
    %20 = arith.subf %16, %19 : vector<8x128xf32>
    %21 = math.exp %20 : vector<8x128xf32>
    %cst_6 = arith.constant dense<0.000000e+00> : vector<8xf32>
    %22 = vector.multi_reduction <add>, %21, %cst_6 [1] : vector<8x128xf32> to vector<8xf32>
    %23 = vector.shape_cast %22 : vector<8xf32> to vector<8x1xf32>
    %24 = math.log %23 : vector<8x1xf32>
    %25 = vector.broadcast %24 : vector<8x1xf32> to vector<8x128xf32>
    %26 = arith.subf %20, %25 : vector<8x128xf32>
    %27 = tpu.reciprocal %23 : vector<8x1xf32> -> vector<8x1xf32>
    %28 = vector.broadcast %27 : vector<8x1xf32> to vector<8x128xf32>
    %29 = arith.mulf %21, %28 : vector<8x128xf32>
    %cst_7 = arith.constant dense<0xFF800000> : vector<8xf32>
    %30 = vector.multi_reduction <maximumf>, %13, %cst_7 [1] : vector<8x128xf32> to vector<8xf32>
    %31 = vector.shape_cast %30 : vector<8xf32> to vector<8x1xf32>
    %32 = vector.broadcast %31 : vector<8x1xf32> to vector<8x128xf32>
    %33 = arith.subf %13, %32 : vector<8x128xf32>
    %34 = math.exp %33 : vector<8x128xf32>
    %cst_8 = arith.constant dense<0.000000e+00> : vector<8xf32>
    %35 = vector.multi_reduction <add>, %34, %cst_8 [1] : vector<8x128xf32> to vector<8xf32>
    %36 = vector.shape_cast %35 : vector<8xf32> to vector<8x1xf32>
    %37 = tpu.reciprocal %36 : vector<8x1xf32> -> vector<8x1xf32>
    %38 = vector.broadcast %37 : vector<8x1xf32> to vector<8x128xf32>
    %39 = arith.mulf %34, %38 : vector<8x128xf32>
    %cst_9 = arith.constant 9.99999997E-7 : f32
    %40 = vector.broadcast %cst_9 : f32 to vector<8x128xf32>
    %41 = arith.addf %29, %40 : vector<8x128xf32>
    %42 = tpu.reciprocal %41 : vector<8x128xf32> -> vector<8x128xf32>
    %43 = arith.mulf %39, %42 : vector<8x128xf32>
    %cst_10 = arith.constant 9.99999997E-7 : f32
    %44 = vector.broadcast %cst_10 : f32 to vector<8x128xf32>
    %45 = arith.addf %44, %43 : vector<8x128xf32>
    %46 = math.log %45 : vector<8x128xf32>
    %47 = arith.mulf %39, %46 : vector<8x128xf32>
    %c0_11 = arith.constant 0 : index
    %c0_12 = arith.constant 0 : index
    %48 = vector.load %arg3[%c0_11, %c0_12] : memref<8x1xi32, #tpu.memory_space<vmem>>, vector<8x1xi32>
    %49 = vector.broadcast %48 : vector<8x1xi32> to vector<8x128xi32>
    %50 = arith.cmpi eq, %4, %49 : vector<8x128xi32>
    %cst_13 = arith.constant 0.000000e+00 : f32
    %51 = vector.broadcast %cst_13 : f32 to vector<8x128xf32>
    %52 = arith.select %50, %26, %51 : vector<8x128xi1>, vector<8x128xf32>
    %53 = arith.subf %47, %52 : vector<8x128xf32>
    %cst_14 = arith.constant dense<0.000000e+00> : vector<8xf32>
    %54 = vector.multi_reduction <add>, %53, %cst_14 [1] : vector<8x128xf32> to vector<8xf32>
    %55 = vector.shape_cast %54 : vector<8xf32> to vector<8x1xf32>
    %cst_15 = arith.constant 0.000000e+00 : f32
    %56 = vector.broadcast %cst_15 : f32 to vector<8x1xf32>
    %57 = arith.select %6, %55, %56 : vector<8x1xi1>, vector<8x1xf32>
    %58 = vector.shape_cast %57 : vector<8x1xf32> to vector<1x8x1xf32>
    %cst_16 = arith.constant dense<0.000000e+00> : vector<1xf32>
    %59 = vector.multi_reduction <add>, %58, %cst_16 [1, 2] : vector<1x8x1xf32> to vector<1xf32>
    %60 = vector.shape_cast %59 : vector<1xf32> to vector<1x1x1xf32>
    %61 = vector.extract %60[0, 0, 0] : f32 from vector<1x1x1xf32>
    %62 = tpu.iota {dimensions = array<i32: 1>} : vector<1x8x128xi32>
    %63 = tpu.iota {dimensions = array<i32: 2>} : vector<1x8x128xi32>
    %c0_i32 = arith.constant 0 : i32
    %64 = vector.broadcast %c0_i32 : i32 to vector<1x8x128xi32>
    %65 = arith.cmpi eq, %62, %64 : vector<1x8x128xi32>
    %c0_i32_17 = arith.constant 0 : i32
    %66 = vector.broadcast %c0_i32_17 : i32 to vector<1x8x128xi32>
    %67 = arith.cmpi eq, %63, %66 : vector<1x8x128xi32>
    %68 = arith.andi %65, %67 : vector<1x8x128xi1>
    %cst_18 = arith.constant 0.000000e+00 : f32
    %69 = vector.broadcast %61 : f32 to vector<1x8x128xf32>
    %70 = vector.broadcast %cst_18 : f32 to vector<1x8x128xf32>
    %71 = arith.select %68, %69, %70 : vector<1x8x128xi1>, vector<1x8x128xf32>
    %c0_19 = arith.constant 0 : index
    %c0_20 = arith.constant 0 : index
    %c0_21 = arith.constant 0 : index
    %72 = vector.load %arg4[%c0_19, %c0_20, %c0_21] : memref<1x8x128xf32, #tpu.memory_space<vmem>>, vector<1x8x128xf32>
    tpu.vector_store %arg4[%c0_19, %c0_20, %c0_21], %71 {strides = array<i32>} : memref<1x8x128xf32, #tpu.memory_space<vmem>>, vector<1x8x128xf32>,
    return
  }
  func.func @transform_0(%arg0: i32) -> (i32, i32) {
    %c0_i32 = arith.constant 0 : i32
    %c0_i32_0 = arith.constant 0 : i32
    return %arg0, %c0_i32 : i32, i32
  }
  func.func @transform_1(%arg0: i32) -> (i32, i32) {
    %c0_i32 = arith.constant 0 : i32
    %c0_i32_0 = arith.constant 0 : i32
    return %arg0, %c0_i32 : i32, i32
  }
  func.func @transform_2(%arg0: i32) -> (i32, i32) {
    %c0_i32 = arith.constant 0 : i32
    %c0_i32_0 = arith.constant 0 : i32
    return %arg0, %c0_i32 : i32, i32
  }
  func.func @transform_3(%arg0: i32) -> (i32, i32, i32) {
    %c0_i32 = arith.constant 0 : i32
    %c0_i32_0 = arith.constant 0 : i32
    %c0_i32_1 = arith.constant 0 : i32
    return %arg0, %c0_i32, %c0_i32_0 : i32, i32, i32
  }
}

</mosaic_0001>

<llo_original>
// kernel: tpu_custom_call.1
$region0: #{tpu_custom_call.1}
  #allocation0 [shape = 'u32[]', space=smem, size = 0x4, offset = 0x4, fixed_abs, tag = 'smem constant byte address 0x4 - core index']
  #allocation1 [shape = 'u32[72,128]{1,0:T(1,128)}', space=vmem, size = 0x9000, scoped, tag = 'internal scratch']
  %s0 = inlined_call_operand.vmem [shape: f32[8,32], index: 0, kind: input, shape index: {}]
  %s1 = inlined_call_operand.hbm [shape: f32[8,32], index: 1, kind: input, shape index: {}]
  %s2 = inlined_call_operand.vmem [shape: s32[8,1], index: 2, kind: input, shape index: {}]
  %s3 = inlined_call_operand.hbm [shape: f32[1,8,128], index: 3, kind: output, shape index: {}]
  %s4 = sld [smem:[#allocation0]]
  $region26: #{tpu_custom_call.1} parent=0
    _
  %s6 = ssub.s32 1, %s4
  %s7 = scalar_select 0, %s6, %s4
  $region1: #{tpu_custom_call.1} parent=0
    #allocation2 [shape = 'u8[4096]{0}', space=vmem, size = 0x1000, scoped, tag = 'input window, operand 1, single buffered']
    #allocation3 [shape = 's32[1]{0}', space=sflag, size = 0x4, scoped, tag = 'scoped memory for tpu_custom_call.1']
    #allocation4 [shape = 's32[1]{0}', space=sflag, size = 0x4, scoped, tag = 'scoped memory for tpu_custom_call.1']
    #allocation5 [shape = 'u8[4096]{0}', space=vmem, size = 0x1000, scoped, tag = 'output window, operand 0, single buffered']
    %8 = vsyncpa [#allocation3], 0
    %9 = vsyncpa [#allocation4], 0
    // Predicated region
    $region2: #{tpu_custom_call.1} parent=1 // pred_check
      _
    $region3: #{tpu_custom_call.1} parent=1 // pred_check_branch
      %11 = sbr.rel (0) target = $region5
    $region4: #{tpu_custom_call.1} parent=1 // pred_region
      _
    $region5: #{tpu_custom_call.1} parent=1 // pred_fallthru
      _
    // Predicated region
    $region6: #{tpu_custom_call.1} parent=1 // pred_check
      _
    $region7: #{tpu_custom_call.1} parent=1 // pred_check_branch
      %13 = sbr.rel (0) target = $region9
    $region8: #{tpu_custom_call.1} parent=1 // pred_region
      %15 = vsyncadd [#allocation3], 0
      %s17 = sshll.u32 %s1, 4
      %s18 = int_to_ptr.hbm [resolvable:$true] %s17
      %s19 = sshll.u32 [#allocation2], 4
      %s20 = int_to_ptr.vmem [resolvable:$true] %s19
      %22 = dma.hbm_to_vmem [thread:$0]  %s18, 128, %s20, [#allocation3]
    $region9: #{tpu_custom_call.1} parent=1 // pred_fallthru
      _
    // Predicated region
    $region10: #{tpu_custom_call.1} parent=1 // pred_check
      _
    $region11: #{tpu_custom_call.1} parent=1 // pred_check_branch
      %24 = sbr.rel (0) target = $region13
    $region12: #{tpu_custom_call.1} parent=1 // pred_region
      _
    $region13: #{tpu_custom_call.1} parent=1 // pred_fallthru
      _
    // Predicated region
    $region14: #{tpu_custom_call.1} parent=1 // pred_check
      _
    $region15: #{tpu_custom_call.1} parent=1 // pred_check_branch
      %26 = sbr.rel (0) target = $region17
    $region16: #{tpu_custom_call.1} parent=1 // pred_region
      %28 = dma.done [#allocation3], 128
    $region17: #{tpu_custom_call.1} parent=1 // pred_fallthru
      _
    %s29 = smul.u32 0, 8
    %v30 = vlaneseq
    %v31 = vshrl.u32 %v30, 7
    %v32 = vstv %s29
    %v33 = vadd.s32 %v32, %v31
    %v34 = vlaneseq
    %v35 = vand.u32 %v34, 127
    %vm36 = vcmp.lt.s32.totalorder %v33, 8
    %vm37 = vcmp.lt.s32.totalorder %v35, 32
    %v38 = vsel %vm36, 1, 0
    %vm39 = vcmp.eq.s32.totalorder %v38, 1
    %vm40 = vmand %vm37, %vm39
    %v41 = vld [vmem:[%s0] sm:$0xff]
    %v42 = vsel %vm40, %v41, -1e+30
    %v43 = vld [vmem:[#allocation2] sm:$0xff]
    %v44 = vsel %vm40, %v43, -1e+30
    %45 = vmax.xlane.f32.xlu0 %v44
    %v46 = vpop.xlane.xlu0 %45
    %v47 = vsub.f32 %v44, %v46
    %v48 = vmul.f32 %v47, 1.442695
    %v49 = vpow.pop %v48
    %50 = vadd.xlane.f32.xlu0 %v49
    %v51 = vpop.xlane.xlu0 %50
    %v52 = vlog2.pop %v51
    %v53 = vmul.f32 %v52, 0.6931472
    %v54 = vsub.f32 %v47, %v53
    %v55 = vrcp.pop %v51
    %v56 = vmul.f32 %v51, %v55
    %v57 = vsub.f32 1.0, %v56
    %v58 = vmul.f32 %v55, %v57
    %v59 = vadd.f32 %v55, %v58
    %vm60 = vweird.f32 %v51
    %vm61 = vweird.f32 %v55
    %vm62 = vmor %vm60, %vm61
    %v63 = vsel %vm62, %v55, %v59
    %v64 = vand.u32 2147483647, %v51
    %vm65 = vcmp.eq.f32.partialorder %v64, 8.507059e+37
    %v66 = vand.u32 %v51, 2147483648
    %v67 = vor.u32 1.1754944e-38, %v66
    %v68 = vsel %vm65, %v67, %v63
    %v69 = vmul.f32 %v49, %v68
    %70 = vmax.xlane.f32.xlu0 %v42
    %v71 = vpop.xlane.xlu0 %70
    %v72 = vsub.f32 %v42, %v71
    %v73 = vmul.f32 %v72, 1.442695
    %v74 = vpow.pop %v73
    %75 = vadd.xlane.f32.xlu0 %v74
    %v76 = vpop.xlane.xlu0 %75
    %v77 = vrcp.pop %v76
    %v78 = vmul.f32 %v76, %v77
    %v79 = vsub.f32 1.0, %v78
    %v80 = vmul.f32 %v77, %v79
    %v81 = vadd.f32 %v77, %v80
    %vm82 = vweird.f32 %v76
    %vm83 = vweird.f32 %v77
    %vm84 = vmor %vm82, %vm83
    %v85 = vsel %vm84, %v77, %v81
    %v86 = vand.u32 2147483647, %v76
    %vm87 = vcmp.eq.f32.partialorder %v86, 8.507059e+37
    %v88 = vand.u32 %v76, 2147483648
    %v89 = vor.u32 1.1754944e-38, %v88
    %v90 = vsel %vm87, %v89, %v85
    %v91 = vmul.f32 %v74, %v90
    %v92 = vadd.f32 %v69, 1e-06
    %v93 = vrcp.pop %v92
    %v94 = vmul.f32 %v92, %v93
    %v95 = vsub.f32 1.0, %v94
    %v96 = vmul.f32 %v93, %v95
    %v97 = vadd.f32 %v93, %v96
    %vm98 = vweird.f32 %v92
    %vm99 = vweird.f32 %v93
    %vm100 = vmor %vm98, %vm99
    %v101 = vsel %vm100, %v93, %v97
    %v102 = vand.u32 2147483647, %v92
    %vm103 = vcmp.eq.f32.partialorder %v102, 8.507059e+37
    %v104 = vand.u32 %v92, 2147483648
    %v105 = vor.u32 1.1754944e-38, %v104
    %v106 = vsel %vm103, %v105, %v101
    %v107 = vmul.f32 %v91, %v106
    %v108 = vadd.f32 %v107, 1e-06
    %v109 = vlog2.pop %v108
    %v110 = vmul.f32 %v109, 0.6931472
    %v111 = vmul.f32 %v91, %v110
    %v112 = vld [vmem:[%s2] sm:$0xff]
    %113 = vset.pattern.permute.xlu0 0
    %114 = vperm.xlu0 %113, %v112
    %v115 = vpop.permute.xlu0 %114
    %vm116 = vcmp.eq.s32.totalorder %v35, %v115
    %v117 = vsel %vm116, %v54, 0.0
    %v118 = vsub.f32 %v111, %v117
    %119 = vadd.xlane.f32.xlu0 %v118
    %v120 = vpop.xlane.xlu0 %119
    %v121 = vsel %vm36, %v120, 0.0
    %vm122 = vcmask 7168
    %v123 = vsel %vm122, %v121, 0.0
    %124 = vadd.xlane.f32.xlu0 %v123
    %v125 = vpop.xlane.xlu0 %124
    %v126 = vrot.slane %v125, 4
    %v127 = vadd.f32 %v125, %v126
    %v128 = vrot.slane %v127, 2
    %v129 = vadd.f32 %v127, %v128
    %v130 = vrot.slane %v129, 1
    %v131 = vadd.f32 %v129, %v130
    %s132 = vtos %v131
    %vm133 = vcmp.eq.s32.totalorder %v31, 0
    %vm134 = vcmp.eq.s32.totalorder %v35, 0
    %vm135 = vmand %vm133, %vm134
    %v136 = vstv %s132
    %v137 = vsel %vm135, %v136, 0.0
    %138 = vst [vmem:[#allocation5] sm:$0xff] %v137
    // Predicated region
    $region18: #{tpu_custom_call.1} parent=1 // pred_check
      _
    $region19: #{tpu_custom_call.1} parent=1 // pred_check_branch
      %140 = sbr.rel (0) target = $region21
    $region20: #{tpu_custom_call.1} parent=1 // pred_region
      %142 = vsyncadd [#allocation4], 0
      %s144 = sshll.u32 [#allocation5], 4
      %s145 = int_to_ptr.vmem [resolvable:$true] %s144
      %s146 = sshll.u32 %s3, 4
      %s147 = int_to_ptr.hbm [resolvable:$true] %s146
      %149 = dma.vmem_to_hbm [thread:$0]  %s145, 128, %s147, [#allocation4]
    $region21: #{tpu_custom_call.1} parent=1 // pred_fallthru
      _
    // Predicated region
    $region22: #{tpu_custom_call.1} parent=1 // pred_check
      _
    $region23: #{tpu_custom_call.1} parent=1 // pred_check_branch
      %151 = sbr.rel (0) target = $region25
    $region24: #{tpu_custom_call.1} parent=1 // pred_region
      %153 = dma.done [#allocation4], 128
    $region25: #{tpu_custom_call.1} parent=1 // pred_fallthru
      _
    %154 = vsyncpa [#allocation3], 1
    %155 = vsyncpa [#allocation4], 1

</llo_original>
